<compile_context>
chip_gen: v7x
topology: tpu7x:2x2x1
jax: 0.10.0
libtpu: 0.0.40
codegen_flags: <defaults>
</compile_context>

<pallas_src>
import functools
import math

import jax
import jax.numpy as jnp
from jax import lax
from jax.experimental import pallas as pl
from jax.experimental.pallas import tpu as pltpu


def _supcon_kernel(b_ref, aT_ref, cid_ref, rid_ref, loss_ref,
                   acc_exp, acc_ml, acc_m, *,
                   loss_scale, n_total, tm, tn):
    """One (anchor-tile i, contrast-tile j) step of the SupCon row reduction.

    b_ref   : [TN, D]  contrast feature tile (streamed over j)
    aT_ref  : [D, TM]  anchor feature tile, pre-transposed, 1/T pre-folded
    cid_ref : [TN, 1]  int32 ids of the contrast rows in this tile
    rid_ref : [1, TM]  int32 ids of the anchor rows in this tile
    loss_ref: [1, TM]  per-anchor loss (lane-dense), written at j == last
    acc_*   : [1, TM]  f32 running sums: exp(logits)*lmask, mask*logits, mask
    """
    # COMPILE FIX: all program_id / num_programs derived scalars are computed
    # here, at the top level of the body, and only captured inside pl.when.
    i = pl.program_id(0)
    j = pl.program_id(1)
    row_start = i * tm            # first anchor (lane) index of this tile
    col_start = j * tn            # first contrast (sublane) index of this tile
    is_first = j == 0
    is_last = j == pl.num_programs(1) - 1

    @pl.when(is_first)
    def _init():
        acc_exp[...] = jnp.zeros_like(acc_exp)
        acc_ml[...] = jnp.zeros_like(acc_ml)
        acc_m[...] = jnp.zeros_like(acc_m)

    # logits tile [TN, TM] on the MXU (f32 accumulate).  1/temperature is
    # folded into aT in the wrapper, so no per-tile VPU scale here.
    logits = jnp.dot(b_ref[...], aT_ref[...], preferred_element_type=jnp.float32)
    e = jnp.exp(logits)                                   # EUP
    same = cid_ref[...] == rid_ref[...]                   # [TN,1]==[1,TM] -> [TN,TM]

    # Tile-position gating: interior tiles (no diagonal overlap, no padded
    # rows/cols) skip the whole iota/compare/mask/multiply chain.
    diag_overlap = jnp.logical_and(row_start < col_start + tn,
                                   col_start < row_start + tm)
    has_pad = jnp.logical_or(col_start + tn > n_total, row_start + tm > n_total)
    needs_mask = jnp.logical_or(diag_overlap, has_pad)

    @pl.when(needs_mask)
    def _boundary_tile():
        jg = col_start + lax.broadcasted_iota(jnp.int32, (tn, tm), 0)  # contrast idx
        ig = row_start + lax.broadcasted_iota(jnp.int32, (tn, tm), 1)  # anchor idx
        not_diag = ig != jg
        col_ok = jg < n_total                              # exclude padded columns
        row_ok = ig < n_total                              # exclude padded anchors
        lm = jnp.logical_and(not_diag, col_ok).astype(jnp.float32)     # logits_mask
        m = (same & not_diag & col_ok & row_ok).astype(jnp.float32)    # positives
        acc_exp[...] += jnp.sum(e * lm, axis=0, keepdims=True)
        acc_ml[...] += jnp.sum(m * logits, axis=0, keepdims=True)
        acc_m[...] += jnp.sum(m, axis=0, keepdims=True)

    @pl.when(jnp.logical_not(needs_mask))
    def _interior_tile():
        m = same.astype(jnp.float32)
        acc_exp[...] += jnp.sum(e, axis=0, keepdims=True)
        acc_ml[...] += jnp.sum(m * logits, axis=0, keepdims=True)
        acc_m[...] += jnp.sum(m, axis=0, keepdims=True)

    @pl.when(is_last)
    def _finalize():
        log_denom = jnp.log(acc_exp[...])
        mean_lp = (acc_ml[...] - acc_m[...] * log_denom) / (acc_m[...] + 1e-10)
        row_loss = (-loss_scale) * mean_lp
        anchor_idx = row_start + lax.broadcasted_iota(jnp.int32, (1, tm), 1)
        valid = (anchor_idx < n_total).astype(jnp.float32)
        loss_ref[...] = row_loss * valid                    # padded anchors -> 0


def supcon_loss_pallas(features, labels=None, *, temperature=0.07,
                       base_temperature=0.07, tm=256, tn=256,
                       matmul_dtype=jnp.bfloat16):
    """features: [bsz, n_views, ...]; labels: optional [bsz] int array.

    matmul_dtype=bf16 (default) gives ~1% loss error for normalized features
    (exp amplifies the bf16 dot error); pass jnp.float32 if you need tighter.
    """
    features = jnp.asarray(features)
    if features.ndim < 3:
        raise ValueError("`features` needs to be [bsz, n_views, ...]")
    bsz, n_views = features.shape[0], features.shape[1]
    feats = features.reshape(bsz, n_views, -1).astype(jnp.float32)
    dim = feats.shape[-1]
    n_total = n_views * bsz

    # contrast_feature = cat(unbind(features, dim=1), dim=0) -> view-major [N, D]
    contrast = jnp.transpose(feats, (1, 0, 2)).reshape(n_total, dim)

    # Row ids: equal id => positive (labels path) / same sample index (SimCLR).
    # TODO(synk): pair_mode=1/2, mask_uncertain_neg=True (bag_label masking),
    # explicit [bsz,bsz] `mask` argument and contrast_mode='one' not implemented
    # (module defaults reproduced).
    if labels is None:
        row_ids = jnp.tile(jnp.arange(bsz, dtype=jnp.int32), n_views)
    else:
        labels = jnp.asarray(labels).reshape(-1)
        if labels.shape[0] != bsz:
            raise ValueError("Num of labels does not match num of features")
        row_ids = jnp.tile(labels.astype(jnp.int32), n_views)

    # Clamp tiles to the 128-rounded problem size, then pad N/D to tile multiples.
    n128 = 128 * (-(-n_total // 128))
    tm = int(min(tm, n128))
    tn = int(min(tn, n128))
    blk = math.lcm(tm, tn)
    n_pad = blk * (-(-n_total // blk))
    d_pad = 128 * (-(-dim // 128))

    contrast_p = jnp.pad(contrast, ((0, n_pad - n_total), (0, d_pad - dim)))
    # Streamed contrast operand [N, D] and resident anchor operand [D, N];
    # 1/temperature is folded ONCE into the anchor copy only (not both!).
    b_mm = contrast_p.astype(matmul_dtype)
    aT_mm = (contrast_p * (1.0 / float(temperature))).astype(matmul_dtype).T

    ids_pad = jnp.full((n_pad,), -1, dtype=jnp.int32).at[:n_total].set(row_ids)
    cid = ids_pad.reshape(n_pad, 1)
    rid = ids_pad.reshape(1, n_pad)

    grid = (n_pad // tm, n_pad // tn)   # row axis parallel, reduction axis last

    # VMEM budget: double-buffered operand blocks + f32 [TN,TM] temporaries.
    itemsize = jnp.dtype(matmul_dtype).itemsize
    est = 2 * (d_pad * tm + tn * d_pad) * itemsize + 8 * tm * tn * 4
    vmem_limit = int(min(64 * 1024 * 1024, max(32 * 1024 * 1024, 2 * est)))

    kernel = functools.partial(
        _supcon_kernel,
        loss_scale=float(temperature) / float(base_temperature),
        n_total=int(n_total), tm=tm, tn=tn)

    row_losses = pl.pallas_call(
        kernel,
        out_shape=jax.ShapeDtypeStruct((1, n_pad), jnp.float32),
        grid_spec=pltpu.PrefetchScalarGridSpec(
            num_scalar_prefetch=0,
            grid=grid,
            in_specs=[
                pl.BlockSpec((tn, d_pad), lambda i, j: (j, 0)),   # contrast (streamed)
                pl.BlockSpec((d_pad, tm), lambda i, j: (0, i)),   # anchors^T (resident)
                pl.BlockSpec((tn, 1), lambda i, j: (j, 0)),       # contrast ids
                pl.BlockSpec((1, tm), lambda i, j: (0, i)),       # anchor ids
            ],
            out_specs=pl.BlockSpec((1, tm), lambda i, j: (0, i)),  # lane-dense loss
            scratch_shapes=[
                pltpu.VMEM((1, tm), jnp.float32),   # sum exp(logits)*logits_mask
                pltpu.VMEM((1, tm), jnp.float32),   # sum mask*logits
                pltpu.VMEM((1, tm), jnp.float32),   # sum mask
            ],
        ),
        compiler_params=pltpu.CompilerParams(
            dimension_semantics=("parallel", "arbitrary"),
            vmem_limit_bytes=vmem_limit),
    )(b_mm, aT_mm, cid, rid)

    # loss.view(anchor_count, bsz).mean() == mean over all N real anchor rows;
    # padded anchor slots are written as exactly 0.
    return jnp.sum(row_losses) / n_total


def _supcon_loss_ref(features, labels=None, *, temperature=0.07,
                     base_temperature=0.07):
    """Pure-JAX f32 reference mirroring the PyTorch forward (pair_mode=0, 'all')."""
    bsz, n_views = features.shape[0], features.shape[1]
    feats = features.reshape(bsz, n_views, -1).astype(jnp.float32)
    contrast = jnp.transpose(feats, (1, 0, 2)).reshape(n_views * bsz, -1)
    n_total = n_views * bsz
    if labels is None:
        base_mask = jnp.eye(bsz, dtype=jnp.float32)
    else:
        lab = jnp.asarray(labels).reshape(-1, 1)
        base_mask = (lab == lab.T).astype(jnp.float32)
    mask = jnp.tile(base_mask, (n_views, n_views))
    logits_mask = 1.0 - jnp.eye(n_total, dtype=jnp.float32)
    mask = mask * logits_mask
    logits = jnp.matmul(contrast, contrast.T,
                        precision=jax.lax.Precision.HIGHEST) / temperature
    exp_logits = jnp.exp(logits) * logits_mask             # no logits_max subtraction
    log_prob = logits - jnp.log(exp_logits.sum(1, keepdims=True))
    mean_log_prob_pos = (mask * log_prob).sum(1) / (mask.sum(1) + 1e-10)
    loss = -(temperature / base_temperature) * mean_log_prob_pos
    return loss.reshape(n_views, bsz).mean()


if __name__ == "__main__":
    key = jax.random.PRNGKey(0)
    k1, k2, k3, k4 = jax.random.split(key, 4)

    def _normalize(x):
        return x / jnp.linalg.norm(x, axis=-1, keepdims=True)

    # --- small test: padding path, both label modes, f32 + bf16 matmul ---
    bsz, n_views, hidden = 4, 2, 32
    feats = _normalize(jax.random.normal(k1, (bsz, n_views, hidden), jnp.float32))
    labels = jax.random.randint(k2, (bsz,), 0, 2, dtype=jnp.int32)

    ref_sup = _supcon_loss_ref(feats, labels)
    out_f32 = jax.block_until_ready(
        supcon_loss_pallas(feats, labels, matmul_dtype=jnp.float32))
    out_bf16 = jax.block_until_ready(supcon_loss_pallas(feats, labels))
    assert jnp.allclose(out_f32, ref_sup, rtol=2e-3, atol=2e-3), (out_f32, ref_sup)
    assert jnp.allclose(out_bf16, ref_sup, rtol=3e-2, atol=3e-2), (out_bf16, ref_sup)

    ref_simclr = _supcon_loss_ref(feats, None)
    out_simclr = jax.block_until_ready(
        supcon_loss_pallas(feats, None, matmul_dtype=jnp.float32))
    assert jnp.allclose(out_simclr, ref_simclr, rtol=2e-3, atol=2e-3), (
        out_simclr, ref_simclr)

    # --- multi-tile test: N=384 (>256), D=192 (>128); exercises multi-step
    #     column accumulation, diagonal/boundary tiles and the interior fast path ---
    bsz2, n_views2, hidden2 = 192, 2, 192
    feats2 = _normalize(jax.random.normal(k3, (bsz2, n_views2, hidden2), jnp.float32))
    labels2 = jax.random.randint(k4, (bsz2,), 0, 4, dtype=jnp.int32)

    ref2 = _supcon_loss_ref(feats2, labels2)
    out2_f32 = jax.block_until_ready(
        supcon_loss_pallas(feats2, labels2, tm=128, tn=128, matmul_dtype=jnp.float32))
    out2_def = jax.block_until_ready(supcon_loss_pallas(feats2, labels2))  # bf16, 256x256
    assert jnp.allclose(out2_f32, ref2, rtol=2e-3, atol=2e-3), (out2_f32, ref2)
    assert jnp.allclose(out2_def, ref2, rtol=3e-2, atol=3e-2), (out2_def, ref2)

    print("KERNEL_OK")
</pallas_src>

<mosaic_0001>
module attributes {stable_mosaic.version = 11 : i64} {
  func.func @_supcon_kernel(%arg0: i32, %arg1: i32, %arg2: memref<128x128xf32, #tpu.memory_space<vmem>>, %arg3: memref<128x128xf32, #tpu.memory_space<vmem>>, %arg4: memref<128x1xi32, #tpu.memory_space<vmem>>, %arg5: memref<1x128xi32, #tpu.memory_space<vmem>>, %arg6: memref<1x128xf32, #tpu.memory_space<vmem>>, %arg7: memref<1x128xf32, #tpu.memory_space<vmem>>, %arg8: memref<1x128xf32, #tpu.memory_space<vmem>>, %arg9: memref<1x128xf32, #tpu.memory_space<vmem>>) attributes {dimension_semantics = [#tpu.dimension_semantics<parallel>, #tpu.dimension_semantics<arbitrary>], iteration_bounds = array<i64: 1, 1>, scalar_prefetch = 0 : i64, scratch_operands = 3 : i64, tpu.core_type = #tpu.core_type<tc>, window_params = [{transform_indices = @transform_0, window_bounds = array<i64: 128, 128>}, {transform_indices = @transform_1, window_bounds = array<i64: 128, 128>}, {transform_indices = @transform_2, window_bounds = array<i64: 128, 1>}, {transform_indices = @transform_3, window_bounds = array<i64: 1, 128>}, {transform_indices = @transform_4, window_bounds = array<i64: 1, 128>}]} {
    %c128_i32 = arith.constant 128 : i32
    %0 = arith.muli %arg0, %c128_i32 : i32
    %c128_i32_0 = arith.constant 128 : i32
    %1 = arith.muli %arg1, %c128_i32_0 : i32
    %c0_i32 = arith.constant 0 : i32
    %2 = arith.cmpi eq, %arg1, %c0_i32 : i32
    %c0_i32_1 = arith.constant 0 : i32
    %3 = arith.cmpi eq, %arg1, %c0_i32_1 : i32
    %4 = arith.extui %2 : i1 to i32
    %c0_i32_2 = arith.constant 0 : i32
    %5 = arith.cmpi ne, %4, %c0_i32_2 : i32
    scf.if %5 {
      %cst_18 = arith.constant 0.000000e+00 : f32
      %33 = vector.broadcast %cst_18 : f32 to vector<1x128xf32>
      %c0_19 = arith.constant 0 : index
      %c0_20 = arith.constant 0 : index
      %34 = vector.load %arg7[%c0_19, %c0_20] : memref<1x128xf32, #tpu.memory_space<vmem>>, vector<1x128xf32>
      tpu.vector_store %arg7[%c0_19, %c0_20], %33 {strides = array<i32>} : memref<1x128xf32, #tpu.memory_space<vmem>>, vector<1x128xf32>,
      %cst_21 = arith.constant 0.000000e+00 : f32
      %35 = vector.broadcast %cst_21 : f32 to vector<1x128xf32>
      %c0_22 = arith.constant 0 : index
      %c0_23 = arith.constant 0 : index
      %36 = vector.load %arg8[%c0_22, %c0_23] : memref<1x128xf32, #tpu.memory_space<vmem>>, vector<1x128xf32>
      tpu.vector_store %arg8[%c0_22, %c0_23], %35 {strides = array<i32>} : memref<1x128xf32, #tpu.memory_space<vmem>>, vector<1x128xf32>,
      %cst_24 = arith.constant 0.000000e+00 : f32
      %37 = vector.broadcast %cst_24 : f32 to vector<1x128xf32>
      %c0_25 = arith.constant 0 : index
      %c0_26 = arith.constant 0 : index
      %38 = vector.load %arg9[%c0_25, %c0_26] : memref<1x128xf32, #tpu.memory_space<vmem>>, vector<1x128xf32>
      tpu.vector_store %arg9[%c0_25, %c0_26], %37 {strides = array<i32>} : memref<1x128xf32, #tpu.memory_space<vmem>>, vector<1x128xf32>,
    } else {
    }
    %c0 = arith.constant 0 : index
    %c0_3 = arith.constant 0 : index
    %6 = vector.load %arg2[%c0, %c0_3] : memref<128x128xf32, #tpu.memory_space<vmem>>, vector<128x128xf32>
    %c0_4 = arith.constant 0 : index
    %c0_5 = arith.constant 0 : index
    %7 = vector.load %arg3[%c0_4, %c0_5] : memref<128x128xf32, #tpu.memory_space<vmem>>, vector<128x128xf32>
    %cst = arith.constant dense<0.000000e+00> : vector<128x128xf32>
    %8 = tpu.matmul %6, %7, %cst {dimension_numbers = #tpu.dot_dimension_numbers<[1], [0], [0], [1], [0, 0, 1, 1], [], []>} : vector<128x128xf32>, vector<128x128xf32>, vector<128x128xf32> -> vector<128x128xf32>
    %9 = math.exp %8 : vector<128x128xf32>
    %c0_6 = arith.constant 0 : index
    %c0_7 = arith.constant 0 : index
    %10 = vector.load %arg4[%c0_6, %c0_7] : memref<128x1xi32, #tpu.memory_space<vmem>>, vector<128x1xi32>
    %c0_8 = arith.constant 0 : index
    %c0_9 = arith.constant 0 : index
    %11 = vector.load %arg5[%c0_8, %c0_9] : memref<1x128xi32, #tpu.memory_space<vmem>>, vector<1x128xi32>
    %12 = vector.broadcast %10 : vector<128x1xi32> to vector<128x128xi32>
    %13 = vector.broadcast %11 : vector<1x128xi32> to vector<128x128xi32>
    %14 = arith.cmpi eq, %12, %13 : vector<128x128xi32>
    %c128_i32_10 = arith.constant 128 : i32
    %15 = arith.addi %1, %c128_i32_10 : i32
    %16 = arith.cmpi slt, %0, %15 : i32
    %c128_i32_11 = arith.constant 128 : i32
    %17 = arith.addi %0, %c128_i32_11 : i32
    %18 = arith.cmpi slt, %1, %17 : i32
    %19 = arith.andi %16, %18 : i1
    %c128_i32_12 = arith.constant 128 : i32
    %20 = arith.addi %1, %c128_i32_12 : i32
    %c8_i32 = arith.constant 8 : i32
    %21 = arith.cmpi sgt, %20, %c8_i32 : i32
    %c128_i32_13 = arith.constant 128 : i32
    %22 = arith.addi %0, %c128_i32_13 : i32
    %c8_i32_14 = arith.constant 8 : i32
    %23 = arith.cmpi sgt, %22, %c8_i32_14 : i32
    %24 = arith.ori %21, %23 : i1
    %25 = arith.ori %19, %24 : i1
    %26 = arith.extui %25 : i1 to i32
    %c0_i32_15 = arith.constant 0 : i32
    %27 = arith.cmpi ne, %26, %c0_i32_15 : i32
    scf.if %27 {
      %33 = tpu.iota {dimensions = array<i32: 0>} : vector<128x128xi32>
      %34 = vector.broadcast %1 : i32 to vector<128x128xi32>
      %35 = arith.addi %34, %33 : vector<128x128xi32>
      %36 = tpu.iota {dimensions = array<i32: 1>} : vector<128x128xi32>
      %37 = vector.broadcast %0 : i32 to vector<128x128xi32>
      %38 = arith.addi %37, %36 : vector<128x128xi32>
      %39 = arith.cmpi ne, %38, %35 : vector<128x128xi32>
      %c8_i32_18 = arith.constant 8 : i32
      %40 = vector.broadcast %c8_i32_18 : i32 to vector<128x128xi32>
      %41 = arith.cmpi slt, %35, %40 : vector<128x128xi32>
      %c8_i32_19 = arith.constant 8 : i32
      %42 = vector.broadcast %c8_i32_19 : i32 to vector<128x128xi32>
      %43 = arith.cmpi slt, %38, %42 : vector<128x128xi32>
      %44 = arith.andi %39, %41 : vector<128x128xi1>
      %45 = arith.extui %44 : vector<128x128xi1> to vector<128x128xi32>
      %46 = arith.sitofp %45 : vector<128x128xi32> to vector<128x128xf32>
      %47 = arith.andi %14, %39 : vector<128x128xi1>
      %48 = arith.andi %47, %41 : vector<128x128xi1>
      %49 = arith.andi %48, %43 : vector<128x128xi1>
      %50 = arith.extui %49 : vector<128x128xi1> to vector<128x128xi32>
      %51 = arith.sitofp %50 : vector<128x128xi32> to vector<128x128xf32>
      %c0_20 = arith.constant 0 : index
      %c0_21 = arith.constant 0 : index
      %52 = vector.load %arg7[%c0_20, %c0_21] : memref<1x128xf32, #tpu.memory_space<vmem>>, vector<1x128xf32>
      %53 = arith.mulf %9, %46 : vector<128x128xf32>
      %cst_22 = arith.constant dense<0.000000e+00> : vector<128xf32>
      %54 = vector.multi_reduction <add>, %53, %cst_22 [0] : vector<128x128xf32> to vector<128xf32>
      %55 = vector.shape_cast %54 : vector<128xf32> to vector<1x128xf32>
      %56 = arith.addf %52, %55 : vector<1x128xf32>
      %c0_23 = arith.constant 0 : index
      %c0_24 = arith.constant 0 : index
      %57 = vector.load %arg7[%c0_23, %c0_24] : memref<1x128xf32, #tpu.memory_space<vmem>>, vector<1x128xf32>
      tpu.vector_store %arg7[%c0_23, %c0_24], %56 {strides = array<i32>} : memref<1x128xf32, #tpu.memory_space<vmem>>, vector<1x128xf32>,
      %c0_25 = arith.constant 0 : index
      %c0_26 = arith.constant 0 : index
      %58 = vector.load %arg8[%c0_25, %c0_26] : memref<1x128xf32, #tpu.memory_space<vmem>>, vector<1x128xf32>
      %59 = arith.mulf %51, %8 : vector<128x128xf32>
      %cst_27 = arith.constant dense<0.000000e+00> : vector<128xf32>
      %60 = vector.multi_reduction <add>, %59, %cst_27 [0] : vector<128x128xf32> to vector<128xf32>
      %61 = vector.shape_cast %60 : vector<128xf32> to vector<1x128xf32>
      %62 = arith.addf %58, %61 : vector<1x128xf32>
      %c0_28 = arith.constant 0 : index
      %c0_29 = arith.constant 0 : index
      %63 = vector.load %arg8[%c0_28, %c0_29] : memref<1x128xf32, #tpu.memory_space<vmem>>, vector<1x128xf32>
      tpu.vector_store %arg8[%c0_28, %c0_29], %62 {strides = array<i32>} : memref<1x128xf32, #tpu.memory_space<vmem>>, vector<1x128xf32>,
      %c0_30 = arith.constant 0 : index
      %c0_31 = arith.constant 0 : index
      %64 = vector.load %arg9[%c0_30, %c0_31] : memref<1x128xf32, #tpu.memory_space<vmem>>, vector<1x128xf32>
      %cst_32 = arith.constant dense<0.000000e+00> : vector<128xf32>
      %65 = vector.multi_reduction <add>, %51, %cst_32 [0] : vector<128x128xf32> to vector<128xf32>
      %66 = vector.shape_cast %65 : vector<128xf32> to vector<1x128xf32>
      %67 = arith.addf %64, %66 : vector<1x128xf32>
      %c0_33 = arith.constant 0 : index
      %c0_34 = arith.constant 0 : index
      %68 = vector.load %arg9[%c0_33, %c0_34] : memref<1x128xf32, #tpu.memory_space<vmem>>, vector<1x128xf32>
      tpu.vector_store %arg9[%c0_33, %c0_34], %67 {strides = array<i32>} : memref<1x128xf32, #tpu.memory_space<vmem>>, vector<1x128xf32>,
    } else {
    }
    %true = arith.constant true
    %28 = arith.xori %25, %true : i1
    %29 = arith.extui %28 : i1 to i32
    %c0_i32_16 = arith.constant 0 : i32
    %30 = arith.cmpi ne, %29, %c0_i32_16 : i32
    scf.if %30 {
      %33 = arith.extui %14 : vector<128x128xi1> to vector<128x128xi32>
      %34 = arith.sitofp %33 : vector<128x128xi32> to vector<128x128xf32>
      %c0_18 = arith.constant 0 : index
      %c0_19 = arith.constant 0 : index
      %35 = vector.load %arg7[%c0_18, %c0_19] : memref<1x128xf32, #tpu.memory_space<vmem>>, vector<1x128xf32>
      %cst_20 = arith.constant dense<0.000000e+00> : vector<128xf32>
      %36 = vector.multi_reduction <add>, %9, %cst_20 [0] : vector<128x128xf32> to vector<128xf32>
      %37 = vector.shape_cast %36 : vector<128xf32> to vector<1x128xf32>
      %38 = arith.addf %35, %37 : vector<1x128xf32>
      %c0_21 = arith.constant 0 : index
      %c0_22 = arith.constant 0 : index
      %39 = vector.load %arg7[%c0_21, %c0_22] : memref<1x128xf32, #tpu.memory_space<vmem>>, vector<1x128xf32>
      tpu.vector_store %arg7[%c0_21, %c0_22], %38 {strides = array<i32>} : memref<1x128xf32, #tpu.memory_space<vmem>>, vector<1x128xf32>,
      %c0_23 = arith.constant 0 : index
      %c0_24 = arith.constant 0 : index
      %40 = vector.load %arg8[%c0_23, %c0_24] : memref<1x128xf32, #tpu.memory_space<vmem>>, vector<1x128xf32>
      %41 = arith.mulf %34, %8 : vector<128x128xf32>
      %cst_25 = arith.constant dense<0.000000e+00> : vector<128xf32>
      %42 = vector.multi_reduction <add>, %41, %cst_25 [0] : vector<128x128xf32> to vector<128xf32>
      %43 = vector.shape_cast %42 : vector<128xf32> to vector<1x128xf32>
      %44 = arith.addf %40, %43 : vector<1x128xf32>
      %c0_26 = arith.constant 0 : index
      %c0_27 = arith.constant 0 : index
      %45 = vector.load %arg8[%c0_26, %c0_27] : memref<1x128xf32, #tpu.memory_space<vmem>>, vector<1x128xf32>
      tpu.vector_store %arg8[%c0_26, %c0_27], %44 {strides = array<i32>} : memref<1x128xf32, #tpu.memory_space<vmem>>, vector<1x128xf32>,
      %c0_28 = arith.constant 0 : index
      %c0_29 = arith.constant 0 : index
      %46 = vector.load %arg9[%c0_28, %c0_29] : memref<1x128xf32, #tpu.memory_space<vmem>>, vector<1x128xf32>
      %cst_30 = arith.constant dense<0.000000e+00> : vector<128xf32>
      %47 = vector.multi_reduction <add>, %34, %cst_30 [0] : vector<128x128xf32> to vector<128xf32>
      %48 = vector.shape_cast %47 : vector<128xf32> to vector<1x128xf32>
      %49 = arith.addf %46, %48 : vector<1x128xf32>
      %c0_31 = arith.constant 0 : index
      %c0_32 = arith.constant 0 : index
      %50 = vector.load %arg9[%c0_31, %c0_32] : memref<1x128xf32, #tpu.memory_space<vmem>>, vector<1x128xf32>
      tpu.vector_store %arg9[%c0_31, %c0_32], %49 {strides = array<i32>} : memref<1x128xf32, #tpu.memory_space<vmem>>, vector<1x128xf32>,
    } else {
    }
    %31 = arith.extui %3 : i1 to i32
    %c0_i32_17 = arith.constant 0 : i32
    %32 = arith.cmpi ne, %31, %c0_i32_17 : i32
    scf.if %32 {
      %c0_18 = arith.constant 0 : index
      %c0_19 = arith.constant 0 : index
      %33 = vector.load %arg7[%c0_18, %c0_19] : memref<1x128xf32, #tpu.memory_space<vmem>>, vector<1x128xf32>
      %34 = math.log %33 : vector<1x128xf32>
      %c0_20 = arith.constant 0 : index
      %c0_21 = arith.constant 0 : index
      %35 = vector.load %arg8[%c0_20, %c0_21] : memref<1x128xf32, #tpu.memory_space<vmem>>, vector<1x128xf32>
      %c0_22 = arith.constant 0 : index
      %c0_23 = arith.constant 0 : index
      %36 = vector.load %arg9[%c0_22, %c0_23] : memref<1x128xf32, #tpu.memory_space<vmem>>, vector<1x128xf32>
      %37 = arith.mulf %36, %34 : vector<1x128xf32>
      %38 = arith.subf %35, %37 : vector<1x128xf32>
      %c0_24 = arith.constant 0 : index
      %c0_25 = arith.constant 0 : index
      %39 = vector.load %arg9[%c0_24, %c0_25] : memref<1x128xf32, #tpu.memory_space<vmem>>, vector<1x128xf32>
      %cst_26 = arith.constant 1.000000e-10 : f32
      %40 = vector.broadcast %cst_26 : f32 to vector<1x128xf32>
      %41 = arith.addf %39, %40 : vector<1x128xf32>
      %42 = arith.divf %38, %41 : vector<1x128xf32>
      %cst_27 = arith.constant -1.000000e+00 : f32
      %43 = vector.broadcast %cst_27 : f32 to vector<1x128xf32>
      %44 = arith.mulf %43, %42 : vector<1x128xf32>
      %45 = tpu.iota {dimensions = array<i32: 1>} : vector<1x128xi32>
      %46 = vector.broadcast %0 : i32 to vector<1x128xi32>
      %47 = arith.addi %46, %45 : vector<1x128xi32>
      %c8_i32_28 = arith.constant 8 : i32
      %48 = vector.broadcast %c8_i32_28 : i32 to vector<1x128xi32>
      %49 = arith.cmpi slt, %47, %48 : vector<1x128xi32>
      %50 = arith.extui %49 : vector<1x128xi1> to vector<1x128xi32>
      %51 = arith.sitofp %50 : vector<1x128xi32> to vector<1x128xf32>
      %52 = arith.mulf %44, %51 : vector<1x128xf32>
      %c0_29 = arith.constant 0 : index
      %c0_30 = arith.constant 0 : index
      %53 = vector.load %arg6[%c0_29, %c0_30] : memref<1x128xf32, #tpu.memory_space<vmem>>, vector<1x128xf32>
      tpu.vector_store %arg6[%c0_29, %c0_30], %52 {strides = array<i32>} : memref<1x128xf32, #tpu.memory_space<vmem>>, vector<1x128xf32>,
    } else {
    }
    return
  }
  func.func @transform_0(%arg0: i32, %arg1: i32) -> (i32, i32) {
    %c0_i32 = arith.constant 0 : i32
    %c0_i32_0 = arith.constant 0 : i32
    return %arg1, %c0_i32 : i32, i32
  }
  func.func @transform_1(%arg0: i32, %arg1: i32) -> (i32, i32) {
    %c0_i32 = arith.constant 0 : i32
    %c0_i32_0 = arith.constant 0 : i32
    return %c0_i32, %arg0 : i32, i32
  }
  func.func @transform_2(%arg0: i32, %arg1: i32) -> (i32, i32) {
    %c0_i32 = arith.constant 0 : i32
    %c0_i32_0 = arith.constant 0 : i32
    return %arg1, %c0_i32 : i32, i32
  }
  func.func @transform_3(%arg0: i32, %arg1: i32) -> (i32, i32) {
    %c0_i32 = arith.constant 0 : i32
    %c0_i32_0 = arith.constant 0 : i32
    return %c0_i32, %arg0 : i32, i32
  }
  func.func @transform_4(%arg0: i32, %arg1: i32) -> (i32, i32) {
    %c0_i32 = arith.constant 0 : i32
    %c0_i32_0 = arith.constant 0 : i32
    return %c0_i32, %arg0 : i32, i32
  }
}

</mosaic_0001>

<llo_original>
// kernel: tpu_custom_call.1
$region0: #{tpu_custom_call.1}
  #allocation0 [shape = 'u32[]', space=smem, size = 0x4, offset = 0x4, fixed_abs, tag = 'smem constant byte address 0x4 - core index']
  #allocation1 [shape = 'u32[144,128]{1,0:T(1,128)}', space=vmem, size = 0x12000, scoped, tag = 'internal scratch']
  #allocation2 [shape = 'f32[1,128]{1,0:T(1,128)}', space=vmem, size = 0x200, scoped, tag = 'scratch operand']
  #allocation3 [shape = 'f32[1,128]{1,0:T(1,128)}', space=vmem, size = 0x200, scoped, tag = 'scratch operand']
  #allocation4 [shape = 'f32[1,128]{1,0:T(1,128)}', space=vmem, size = 0x200, scoped, tag = 'scratch operand']
  %s0 = inlined_call_operand.vmem [shape: f32[128,128], index: 0, kind: input, shape index: {}]
  %s1 = inlined_call_operand.hbm [shape: f32[128,128], index: 1, kind: input, shape index: {}]
  %s2 = inlined_call_operand.vmem [shape: s32[128,1], index: 2, kind: input, shape index: {}]
  %s3 = inlined_call_operand.vmem [shape: s32[1,128], index: 3, kind: input, shape index: {}]
  %s4 = inlined_call_operand.hbm [shape: f32[1,128], index: 4, kind: output, shape index: {}]
  %s5 = sld [smem:[#allocation0]]
  $region46: #{tpu_custom_call.1} parent=0
    _
  %s7 = ssub.s32 1, %s5
  %s8 = scalar_select 0, %s7, %s5
  $region1: #{tpu_custom_call.1} parent=0
    #allocation5 [shape = 'u8[65536]{0}', space=vmem, size = 0x10000, scoped, tag = 'input window, operand 1, single buffered']
    #allocation6 [shape = 's32[1]{0}', space=sflag, size = 0x4, scoped, tag = 'scoped memory for tpu_custom_call.1']
    #allocation7 [shape = 's32[1]{0}', space=sflag, size = 0x4, scoped, tag = 'scoped memory for tpu_custom_call.1']
    #allocation8 [shape = 'u8[512]{0}', space=vmem, size = 0x400, scoped, tag = 'output window, operand 0, single buffered']
    %9 = vsyncpa [#allocation6], 0
    %10 = vsyncpa [#allocation7], 0
    // Predicated region
    $region2: #{tpu_custom_call.1} parent=1 // pred_check
      _
    $region3: #{tpu_custom_call.1} parent=1 // pred_check_branch
      %12 = sbr.rel (0) target = $region5
    $region4: #{tpu_custom_call.1} parent=1 // pred_region
      _
    $region5: #{tpu_custom_call.1} parent=1 // pred_fallthru
      _
    // Predicated region
    $region6: #{tpu_custom_call.1} parent=1 // pred_check
      _
    $region7: #{tpu_custom_call.1} parent=1 // pred_check_branch
      %14 = sbr.rel (0) target = $region9
    $region8: #{tpu_custom_call.1} parent=1 // pred_region
      %s16 = ssub.s32 2048, 2048
      %17 = vsyncadd [#allocation6], %s16
      %s18 = sshll.u32 [#allocation5], 4
      %s19 = int_to_ptr.vmem [resolvable:$true] %s18
      %24 = dma.hbm_to_vmem [thread:$0]  %s1, 2048, %s19, [#allocation6], 128, 128, 8
    $region9: #{tpu_custom_call.1} parent=1 // pred_fallthru
      _
    // Predicated region
    $region10: #{tpu_custom_call.1} parent=1 // pred_check
      _
    $region11: #{tpu_custom_call.1} parent=1 // pred_check_branch
      %26 = sbr.rel (0) target = $region13
    $region12: #{tpu_custom_call.1} parent=1 // pred_region
      _
    $region13: #{tpu_custom_call.1} parent=1 // pred_fallthru
      _
    // Predicated region
    $region14: #{tpu_custom_call.1} parent=1 // pred_check
      _
    $region15: #{tpu_custom_call.1} parent=1 // pred_check_branch
      %28 = sbr.rel (0) target = $region17
    $region16: #{tpu_custom_call.1} parent=1 // pred_region
      _
    $region17: #{tpu_custom_call.1} parent=1 // pred_fallthru
      _
    // Predicated region
    $region18: #{tpu_custom_call.1} parent=1 // pred_check
      _
    $region19: #{tpu_custom_call.1} parent=1 // pred_check_branch
      %30 = sbr.rel (0) target = $region21
    $region20: #{tpu_custom_call.1} parent=1 // pred_region
      %31 = dma.done [#allocation6], 2048
    $region21: #{tpu_custom_call.1} parent=1 // pred_fallthru
      _
    %s32 = smul.u32 0, 128
    %s33 = smul.u32 0, 128
    %p34 = scmp.eq.s32.totalorder 0, 0
    // Predicated region
    $region22: #{tpu_custom_call.1} parent=1 // pred_check
      %p35 = pneg %p34
    $region23: #{tpu_custom_call.1} parent=1 // pred_check_branch
      %37 = sbr.rel (%p35) target = $region25
    $region24: #{tpu_custom_call.1} parent=1 // pred_region
      %38 = vst [vmem:[#allocation2] sm:$0x1] 0.0
      %39 = vst [vmem:[#allocation3] sm:$0x1] 0.0
      %40 = vst [vmem:[#allocation4] sm:$0x1] 0.0
    $region25: #{tpu_custom_call.1} parent=1 // pred_fallthru
      _
    %v41 = vld [vmem:[%s0] sm:$0xff]
    %v42 = vld [vmem:[%s0 + $0x8] sm:$0xff]
    %v43 = vld [vmem:[%s0 + $0x10] sm:$0xff]
    %v44 = vld [vmem:[%s0 + $0x18] sm:$0xff]
    %v45 = vld [vmem:[%s0 + $0x20] sm:$0xff]
    %v46 = vld [vmem:[%s0 + $0x28] sm:$0xff]
    %v47 = vld [vmem:[%s0 + $0x30] sm:$0xff]
    %v48 = vld [vmem:[%s0 + $0x38] sm:$0xff]
    %v49 = vld [vmem:[%s0 + $0x40] sm:$0xff]
    %v50 = vld [vmem:[%s0 + $0x48] sm:$0xff]
    %v51 = vld [vmem:[%s0 + $0x50] sm:$0xff]
    %v52 = vld [vmem:[%s0 + $0x58] sm:$0xff]
    %v53 = vld [vmem:[%s0 + $0x60] sm:$0xff]
    %v54 = vld [vmem:[%s0 + $0x68] sm:$0xff]
    %v55 = vld [vmem:[%s0 + $0x70] sm:$0xff]
    %v56 = vld [vmem:[%s0 + $0x78] sm:$0xff]
    %v57 = vld [vmem:[#allocation5] sm:$0xff]
    %v58 = vld [vmem:[#allocation5 + $0x8] sm:$0xff]
    %v59 = vld [vmem:[#allocation5 + $0x10] sm:$0xff]
    %v60 = vld [vmem:[#allocation5 + $0x18] sm:$0xff]
    %v61 = vld [vmem:[#allocation5 + $0x20] sm:$0xff]
    %v62 = vld [vmem:[#allocation5 + $0x28] sm:$0xff]
    %v63 = vld [vmem:[#allocation5 + $0x30] sm:$0xff]
    %v64 = vld [vmem:[#allocation5 + $0x38] sm:$0xff]
    %v65 = vld [vmem:[#allocation5 + $0x40] sm:$0xff]
    %v66 = vld [vmem:[#allocation5 + $0x48] sm:$0xff]
    %v67 = vld [vmem:[#allocation5 + $0x50] sm:$0xff]
    %v68 = vld [vmem:[#allocation5 + $0x58] sm:$0xff]
    %v69 = vld [vmem:[#allocation5 + $0x60] sm:$0xff]
    %v70 = vld [vmem:[#allocation5 + $0x68] sm:$0xff]
    %v71 = vld [vmem:[#allocation5 + $0x70] sm:$0xff]
    %v72 = vld [vmem:[#allocation5 + $0x78] sm:$0xff]
    %73 = vmatprep.subr.mxu0 0.0
    %74 = vmatpush1.msra.mxu0 %v57
    %75 = vmatprep.subr.mxu0 0.0
    %76 = vmatpush1.msra.mxu0 %v58
    %77 = vmatprep.subr.mxu0 0.0
    %78 = vmatpush1.msra.mxu0 %v59
    %79 = vmatprep.subr.mxu0 0.0
    %80 = vmatpush1.msra.mxu0 %v60
    %81 = vmatprep.subr.mxu0 0.0
    %82 = vmatpush1.msra.mxu0 %v61
    %83 = vmatprep.subr.mxu0 0.0
    %84 = vmatpush1.msra.mxu0 %v62
    %85 = vmatprep.subr.mxu0 0.0
    %86 = vmatpush1.msra.mxu0 %v63
    %87 = vmatprep.subr.mxu0 0.0
    %88 = vmatpush1.msra.mxu0 %v64
    %89 = vmatprep.subr.mxu0 0.0
    %90 = vmatpush1.msra.mxu0 %v65
    %91 = vmatprep.subr.mxu0 0.0
    %92 = vmatpush1.msra.mxu0 %v66
    %93 = vmatprep.subr.mxu0 0.0
    %94 = vmatpush1.msra.mxu0 %v67
    %95 = vmatprep.subr.mxu0 0.0
    %96 = vmatpush1.msra.mxu0 %v68
    %97 = vmatprep.subr.mxu0 0.0
    %98 = vmatpush1.msra.mxu0 %v69
    %99 = vmatprep.subr.mxu0 0.0
    %100 = vmatpush1.msra.mxu0 %v70
    %101 = vmatprep.subr.mxu0 0.0
    %102 = vmatpush1.msra.mxu0 %v71
    %103 = vmatprep.subr.mxu0 0.0
    %104 = vmatpush1.msra.mxu0 %v72
    %105 = vmatprep.subr.mxu0 0.0
    %106 = vmatpush1.msra.mxu0 0.0
    %107 = vmatprep.subr.mxu0 0.0
    %108 = vmatpush1.msra.mxu0 0.0
    %109 = vmatprep.subr.mxu0 0.0
    %110 = vmatpush1.msra.mxu0 0.0
    %111 = vmatprep.subr.mxu0 0.0
    %112 = vmatpush1.msra.mxu0 0.0
    %113 = vmatprep.subr.mxu0 0.0
    %114 = vmatpush1.msra.mxu0 0.0
    %115 = vmatprep.subr.mxu0 0.0
    %116 = vmatpush1.msra.mxu0 0.0
    %117 = vmatprep.subr.mxu0 0.0
    %118 = vmatpush1.msra.mxu0 0.0
    %119 = vmatprep.subr.mxu0 0.0
    %120 = vmatpush1.msra.mxu0 0.0
    %121 = vmatprep.subr.mxu0 0.0
    %122 = vmatpush1.msra.mxu0 0.0
    %123 = vmatprep.subr.mxu0 0.0
    %124 = vmatpush1.msra.mxu0 0.0
    %125 = vmatprep.subr.mxu0 0.0
    %126 = vmatpush1.msra.mxu0 0.0
    %127 = vmatprep.subr.mxu0 0.0
    %128 = vmatpush1.msra.mxu0 0.0
    %129 = vmatprep.subr.mxu0 0.0
    %130 = vmatpush1.msra.mxu0 0.0
    %131 = vmatprep.subr.mxu0 0.0
    %132 = vmatpush1.msra.mxu0 0.0
    %133 = vmatprep.subr.mxu0 0.0
    %134 = vmatpush1.msra.mxu0 0.0
    %135 = vmatprep.subr.mxu0 0.0
    %136 = vmatpush1.msra.mxu0 0.0
    %137 = vmatprep.mubr.f32.mxu0 0.0
    %138 = vmatmul.mubr.f32.gmra.mrb[0].mxu0 %v41
    %v139 = vpop.f32.mrb[0].mxu0
    %v140 = vadd.f32 0.0, %v139
    %v141 = vpop.f32.mrb[0].mxu0
    %142 = vmatprep.mubr.f32.mxu0 0.0
    %143 = vmatmul.mubr.f32.gmra.mrb[0].mxu0 %v42
    %v144 = vpop.f32.mrb[0].mxu0
    %v145 = vadd.f32 0.0, %v144
    %v146 = vpop.f32.mrb[0].mxu0
    %147 = vmatprep.mubr.f32.mxu0 0.0
    %148 = vmatmul.mubr.f32.gmra.mrb[0].mxu0 %v43
    %v149 = vpop.f32.mrb[0].mxu0
    %v150 = vadd.f32 0.0, %v149
    %v151 = vpop.f32.mrb[0].mxu0
    %152 = vmatprep.mubr.f32.mxu0 0.0
    %153 = vmatmul.mubr.f32.gmra.mrb[0].mxu0 %v44
    %v154 = vpop.f32.mrb[0].mxu0
    %v155 = vadd.f32 0.0, %v154
    %v156 = vpop.f32.mrb[0].mxu0
    %157 = vmatprep.mubr.f32.mxu0 0.0
    %158 = vmatmul.mubr.f32.gmra.mrb[0].mxu0 %v45
    %v159 = vpop.f32.mrb[0].mxu0
    %v160 = vadd.f32 0.0, %v159
    %v161 = vpop.f32.mrb[0].mxu0
    %162 = vmatprep.mubr.f32.mxu0 0.0
    %163 = vmatmul.mubr.f32.gmra.mrb[0].mxu0 %v46
    %v164 = vpop.f32.mrb[0].mxu0
    %v165 = vadd.f32 0.0, %v164
    %v166 = vpop.f32.mrb[0].mxu0
    %167 = vmatprep.mubr.f32.mxu0 0.0
    %168 = vmatmul.mubr.f32.gmra.mrb[0].mxu0 %v47
    %v169 = vpop.f32.mrb[0].mxu0
    %v170 = vadd.f32 0.0, %v169
    %v171 = vpop.f32.mrb[0].mxu0
    %172 = vmatprep.mubr.f32.mxu0 0.0
    %173 = vmatmul.mubr.f32.gmra.mrb[0].mxu0 %v48
    %v174 = vpop.f32.mrb[0].mxu0
    %v175 = vadd.f32 0.0, %v174
    %v176 = vpop.f32.mrb[0].mxu0
    %177 = vmatprep.mubr.f32.mxu0 0.0
    %178 = vmatmul.mubr.f32.gmra.mrb[0].mxu0 %v49
    %v179 = vpop.f32.mrb[0].mxu0
    %v180 = vadd.f32 0.0, %v179
    %v181 = vpop.f32.mrb[0].mxu0
    %182 = vmatprep.mubr.f32.mxu0 0.0
    %183 = vmatmul.mubr.f32.gmra.mrb[0].mxu0 %v50
    %v184 = vpop.f32.mrb[0].mxu0
    %v185 = vadd.f32 0.0, %v184
    %v186 = vpop.f32.mrb[0].mxu0
    %187 = vmatprep.mubr.f32.mxu0 0.0
    %188 = vmatmul.mubr.f32.gmra.mrb[0].mxu0 %v51
    %v189 = vpop.f32.mrb[0].mxu0
    %v190 = vadd.f32 0.0, %v189
    %v191 = vpop.f32.mrb[0].mxu0
    %192 = vmatprep.mubr.f32.mxu0 0.0
    %193 = vmatmul.mubr.f32.gmra.mrb[0].mxu0 %v52
    %v194 = vpop.f32.mrb[0].mxu0
    %v195 = vadd.f32 0.0, %v194
    %v196 = vpop.f32.mrb[0].mxu0
    %197 = vmatprep.mubr.f32.mxu0 0.0
    %198 = vmatmul.mubr.f32.gmra.mrb[0].mxu0 %v53
    %v199 = vpop.f32.mrb[0].mxu0
    %v200 = vadd.f32 0.0, %v199
    %v201 = vpop.f32.mrb[0].mxu0
    %202 = vmatprep.mubr.f32.mxu0 0.0
    %203 = vmatmul.mubr.f32.gmra.mrb[0].mxu0 %v54
    %v204 = vpop.f32.mrb[0].mxu0
    %v205 = vadd.f32 0.0, %v204
    %v206 = vpop.f32.mrb[0].mxu0
    %207 = vmatprep.mubr.f32.mxu0 0.0
    %208 = vmatmul.mubr.f32.gmra.mrb[0].mxu0 %v55
    %v209 = vpop.f32.mrb[0].mxu0
    %v210 = vadd.f32 0.0, %v209
    %v211 = vpop.f32.mrb[0].mxu0
    %212 = vmatprep.mubr.f32.mxu0 0.0
    %213 = vmatmul.mubr.f32.gmra.mrb[0].mxu0 %v56
    %v214 = vpop.f32.mrb[0].mxu0
    %v215 = vadd.f32 0.0, %v214
    %v216 = vpop.f32.mrb[0].mxu0
    %217 = vdwg.mxu0
    %v218 = vmul.f32 %v140, 1.442695
    %v219 = vpow.pop %v218
    %v220 = vmul.f32 %v145, 1.442695
    %v221 = vpow.pop %v220
    %v222 = vmul.f32 %v150, 1.442695
    %v223 = vpow.pop %v222
    %v224 = vmul.f32 %v155, 1.442695
    %v225 = vpow.pop %v224
    %v226 = vmul.f32 %v160, 1.442695
    %v227 = vpow.pop %v226
    %v228 = vmul.f32 %v165, 1.442695
    %v229 = vpow.pop %v228
    %v230 = vmul.f32 %v170, 1.442695
    %v231 = vpow.pop %v230
    %v232 = vmul.f32 %v175, 1.442695
    %v233 = vpow.pop %v232
    %v234 = vmul.f32 %v180, 1.442695
    %v235 = vpow.pop %v234
    %v236 = vmul.f32 %v185, 1.442695
    %v237 = vpow.pop %v236
    %v238 = vmul.f32 %v190, 1.442695
    %v239 = vpow.pop %v238
    %v240 = vmul.f32 %v195, 1.442695
    %v241 = vpow.pop %v240
    %v242 = vmul.f32 %v200, 1.442695
    %v243 = vpow.pop %v242
    %v244 = vmul.f32 %v205, 1.442695
    %v245 = vpow.pop %v244
    %v246 = vmul.f32 %v210, 1.442695
    %v247 = vpow.pop %v246
    %v248 = vmul.f32 %v215, 1.442695
    %v249 = vpow.pop %v248
    %v250 = vld [vmem:[%s2] sm:$0xff]
    %v251 = vld [vmem:[%s2 + $0x8] sm:$0xff]
    %v252 = vld [vmem:[%s2 + $0x10] sm:$0xff]
    %v253 = vld [vmem:[%s2 + $0x18] sm:$0xff]
    %v254 = vld [vmem:[%s2 + $0x20] sm:$0xff]
    %v255 = vld [vmem:[%s2 + $0x28] sm:$0xff]
    %v256 = vld [vmem:[%s2 + $0x30] sm:$0xff]
    %v257 = vld [vmem:[%s2 + $0x38] sm:$0xff]
    %v258 = vld [vmem:[%s2 + $0x40] sm:$0xff]
    %v259 = vld [vmem:[%s2 + $0x48] sm:$0xff]
    %v260 = vld [vmem:[%s2 + $0x50] sm:$0xff]
    %v261 = vld [vmem:[%s2 + $0x58] sm:$0xff]
    %v262 = vld [vmem:[%s2 + $0x60] sm:$0xff]
    %v263 = vld [vmem:[%s2 + $0x68] sm:$0xff]
    %v264 = vld [vmem:[%s2 + $0x70] sm:$0xff]
    %v265 = vld [vmem:[%s2 + $0x78] sm:$0xff]
    %v266 = vld [vmem:[%s3] sm:$0x1]
    %267 = vset.pattern.permute.xlu0 0
    %268 = vperm.xlu0 %267, %v250
    %v269 = vpop.permute.xlu0 %268
    %270 = vset.pattern.permute.xlu0 0
    %271 = vperm.xlu0 %270, %v251
    %v272 = vpop.permute.xlu0 %271
    %273 = vset.pattern.permute.xlu0 0
    %274 = vperm.xlu0 %273, %v252
    %v275 = vpop.permute.xlu0 %274
    %276 = vset.pattern.permute.xlu0 0
    %277 = vperm.xlu0 %276, %v253
    %v278 = vpop.permute.xlu0 %277
    %279 = vset.pattern.permute.xlu0 0
    %280 = vperm.xlu0 %279, %v254
    %v281 = vpop.permute.xlu0 %280
    %282 = vset.pattern.permute.xlu0 0
    %283 = vperm.xlu0 %282, %v255
    %v284 = vpop.permute.xlu0 %283
    %285 = vset.pattern.permute.xlu0 0
    %286 = vperm.xlu0 %285, %v256
    %v287 = vpop.permute.xlu0 %286
    %288 = vset.pattern.permute.xlu0 0
    %289 = vperm.xlu0 %288, %v257
    %v290 = vpop.permute.xlu0 %289
    %291 = vset.pattern.permute.xlu0 0
    %292 = vperm.xlu0 %291, %v258
    %v293 = vpop.permute.xlu0 %292
    %294 = vset.pattern.permute.xlu0 0
    %295 = vperm.xlu0 %294, %v259
    %v296 = vpop.permute.xlu0 %295
    %297 = vset.pattern.permute.xlu0 0
    %298 = vperm.xlu0 %297, %v260
    %v299 = vpop.permute.xlu0 %298
    %300 = vset.pattern.permute.xlu0 0
    %301 = vperm.xlu0 %300, %v261
    %v302 = vpop.permute.xlu0 %301
    %303 = vset.pattern.permute.xlu0 0
    %304 = vperm.xlu0 %303, %v262
    %v305 = vpop.permute.xlu0 %304
    %306 = vset.pattern.permute.xlu0 0
    %307 = vperm.xlu0 %306, %v263
    %v308 = vpop.permute.xlu0 %307
    %309 = vset.pattern.permute.xlu0 0
    %310 = vperm.xlu0 %309, %v264
    %v311 = vpop.permute.xlu0 %310
    %312 = vset.pattern.permute.xlu0 0
    %313 = vperm.xlu0 %312, %v265
    %v314 = vpop.permute.xlu0 %313
    %v315 = vlaneseq
    %v316 = vshrl.u32 %v315, 7
    %v317 = vsub.s32 0, %v316
    %v318 = vrot.slane %v266, %v317
    %vm319 = vcmp.eq.s32.totalorder %v269, %v318
    %vm320 = vcmp.eq.s32.totalorder %v272, %v318
    %vm321 = vcmp.eq.s32.totalorder %v275, %v318
    %vm322 = vcmp.eq.s32.totalorder %v278, %v318
    %vm323 = vcmp.eq.s32.totalorder %v281, %v318
    %vm324 = vcmp.eq.s32.totalorder %v284, %v318
    %vm325 = vcmp.eq.s32.totalorder %v287, %v318
    %vm326 = vcmp.eq.s32.totalorder %v290, %v318
    %vm327 = vcmp.eq.s32.totalorder %v293, %v318
    %vm328 = vcmp.eq.s32.totalorder %v296, %v318
    %vm329 = vcmp.eq.s32.totalorder %v299, %v318
    %vm330 = vcmp.eq.s32.totalorder %v302, %v318
    %vm331 = vcmp.eq.s32.totalorder %v305, %v318
    %vm332 = vcmp.eq.s32.totalorder %v308, %v318
    %vm333 = vcmp.eq.s32.totalorder %v311, %v318
    %vm334 = vcmp.eq.s32.totalorder %v314, %v318
    %s335 = sadd.s32 %s33, 128
    %p336 = scmp.lt.s32.totalorder %s32, %s335
    %s337 = sadd.s32 %s32, 128
    %p338 = scmp.lt.s32.totalorder %s33, %s337
    %p339 = pnand %p336, %p338
    %p340 = pneg %p339
    %p341 = scmp.gt.s32.totalorder %s335, 8
    %p342 = scmp.gt.s32.totalorder %s337, 8
    %p343 = por %p341, %p342
    %p344 = por %p340, %p343
    // Predicated region
    $region26: #{tpu_custom_call.1} parent=1 // pred_check
      %p345 = pneg %p344
    $region27: #{tpu_custom_call.1} parent=1 // pred_check_branch
      %347 = sbr.rel (%p345) target = $region29
    $region28: #{tpu_custom_call.1} parent=1 // pred_region
      %v348 = vlaneseq
      %v349 = vshrl.u32 %v348, 7
      %v350 = vadd.s32 %v349, 8
      %v351 = vadd.s32 %v349, 16
      %v352 = vadd.s32 %v349, 24
      %v353 = vadd.s32 %v349, 32
      %v354 = vadd.s32 %v349, 40
      %v355 = vadd.s32 %v349, 48
      %v356 = vadd.s32 %v349, 56
      %v357 = vadd.s32 %v349, 64
      %v358 = vadd.s32 %v349, 72
      %v359 = vadd.s32 %v349, 80
      %v360 = vadd.s32 %v349, 88
      %v361 = vadd.s32 %v349, 96
      %v362 = vadd.s32 %v349, 104
      %v363 = vadd.s32 %v349, 112
      %v364 = vadd.s32 %v349, 120
      %v365 = vstv %s33
      %v366 = vadd.s32 %v365, %v349
      %v367 = vadd.s32 %v365, %v350
      %v368 = vadd.s32 %v365, %v351
      %v369 = vadd.s32 %v365, %v352
      %v370 = vadd.s32 %v365, %v353
      %v371 = vadd.s32 %v365, %v354
      %v372 = vadd.s32 %v365, %v355
      %v373 = vadd.s32 %v365, %v356
      %v374 = vadd.s32 %v365, %v357
      %v375 = vadd.s32 %v365, %v358
      %v376 = vadd.s32 %v365, %v359
      %v377 = vadd.s32 %v365, %v360
      %v378 = vadd.s32 %v365, %v361
      %v379 = vadd.s32 %v365, %v362
      %v380 = vadd.s32 %v365, %v363
      %v381 = vadd.s32 %v365, %v364
      %v382 = vlaneseq
      %v383 = vand.u32 %v382, 127
      %v384 = vstv %s32
      %v385 = vadd.s32 %v384, %v383
      %vm386 = vcmp.ne.s32.totalorder %v385, %v366
      %vm387 = vcmp.ne.s32.totalorder %v385, %v367
      %vm388 = vcmp.ne.s32.totalorder %v385, %v368
      %vm389 = vcmp.ne.s32.totalorder %v385, %v369
      %vm390 = vcmp.ne.s32.totalorder %v385, %v370
      %vm391 = vcmp.ne.s32.totalorder %v385, %v371
      %vm392 = vcmp.ne.s32.totalorder %v385, %v372
      %vm393 = vcmp.ne.s32.totalorder %v385, %v373
      %vm394 = vcmp.ne.s32.totalorder %v385, %v374
      %vm395 = vcmp.ne.s32.totalorder %v385, %v375
      %vm396 = vcmp.ne.s32.totalorder %v385, %v376
      %vm397 = vcmp.ne.s32.totalorder %v385, %v377
      %vm398 = vcmp.ne.s32.totalorder %v385, %v378
      %vm399 = vcmp.ne.s32.totalorder %v385, %v379
      %vm400 = vcmp.ne.s32.totalorder %v385, %v380
      %vm401 = vcmp.ne.s32.totalorder %v385, %v381
      %vm402 = vcmp.lt.s32.totalorder %v366, 8
      %vm403 = vcmp.lt.s32.totalorder %v367, 8
      %vm404 = vcmp.lt.s32.totalorder %v368, 8
      %vm405 = vcmp.lt.s32.totalorder %v369, 8
      %vm406 = vcmp.lt.s32.totalorder %v370, 8
      %vm407 = vcmp.lt.s32.totalorder %v371, 8
      %vm408 = vcmp.lt.s32.totalorder %v372, 8
      %vm409 = vcmp.lt.s32.totalorder %v373, 8
      %vm410 = vcmp.lt.s32.totalorder %v374, 8
      %vm411 = vcmp.lt.s32.totalorder %v375, 8
      %vm412 = vcmp.lt.s32.totalorder %v376, 8
      %vm413 = vcmp.lt.s32.totalorder %v377, 8
      %vm414 = vcmp.lt.s32.totalorder %v378, 8
      %vm415 = vcmp.lt.s32.totalorder %v379, 8
      %vm416 = vcmp.lt.s32.totalorder %v380, 8
      %vm417 = vcmp.lt.s32.totalorder %v381, 8
      %vm418 = vcmp.lt.s32.totalorder %v385, 8
      %vm419 = vmand %vm386, %vm402
      %vm420 = vmand %vm387, %vm403
      %vm421 = vmand %vm388, %vm404
      %vm422 = vmand %vm389, %vm405
      %vm423 = vmand %vm390, %vm406
      %vm424 = vmand %vm391, %vm407
      %vm425 = vmand %vm392, %vm408
      %vm426 = vmand %vm393, %vm409
      %vm427 = vmand %vm394, %vm410
      %vm428 = vmand %vm395, %vm411
      %vm429 = vmand %vm396, %vm412
      %vm430 = vmand %vm397, %vm413
      %vm431 = vmand %vm398, %vm414
      %vm432 = vmand %vm399, %vm415
      %vm433 = vmand %vm400, %vm416
      %vm434 = vmand %vm401, %vm417
      %v435 = vsel %vm419, 1, 0
      %v436 = vsel %vm420, 1, 0
      %v437 = vsel %vm421, 1, 0
      %v438 = vsel %vm422, 1, 0
      %v439 = vsel %vm423, 1, 0
      %v440 = vsel %vm424, 1, 0
      %v441 = vsel %vm425, 1, 0
      %v442 = vsel %vm426, 1, 0
      %v443 = vsel %vm427, 1, 0
      %v444 = vsel %vm428, 1, 0
      %v445 = vsel %vm429, 1, 0
      %v446 = vsel %vm430, 1, 0
      %v447 = vsel %vm431, 1, 0
      %v448 = vsel %vm432, 1, 0
      %v449 = vsel %vm433, 1, 0
      %v450 = vsel %vm434, 1, 0
      %v451 = vcvt.s32.f32 %v435
      %v452 = vcvt.s32.f32 %v436
      %v453 = vcvt.s32.f32 %v437
      %v454 = vcvt.s32.f32 %v438
      %v455 = vcvt.s32.f32 %v439
      %v456 = vcvt.s32.f32 %v440
      %v457 = vcvt.s32.f32 %v441
      %v458 = vcvt.s32.f32 %v442
      %v459 = vcvt.s32.f32 %v443
      %v460 = vcvt.s32.f32 %v444
      %v461 = vcvt.s32.f32 %v445
      %v462 = vcvt.s32.f32 %v446
      %v463 = vcvt.s32.f32 %v447
      %v464 = vcvt.s32.f32 %v448
      %v465 = vcvt.s32.f32 %v449
      %v466 = vcvt.s32.f32 %v450
      %vm467 = vmand %vm319, %vm386
      %vm468 = vmand %vm320, %vm387
      %vm469 = vmand %vm321, %vm388
      %vm470 = vmand %vm322, %vm389
      %vm471 = vmand %vm323, %vm390
      %vm472 = vmand %vm324, %vm391
      %vm473 = vmand %vm325, %vm392
      %vm474 = vmand %vm326, %vm393
      %vm475 = vmand %vm327, %vm394
      %vm476 = vmand %vm328, %vm395
      %vm477 = vmand %vm329, %vm396
      %vm478 = vmand %vm330, %vm397
      %vm479 = vmand %vm331, %vm398
      %vm480 = vmand %vm332, %vm399
      %vm481 = vmand %vm333, %vm400
      %vm482 = vmand %vm334, %vm401
      %vm483 = vmand %vm467, %vm402
      %vm484 = vmand %vm468, %vm403
      %vm485 = vmand %vm469, %vm404
      %vm486 = vmand %vm470, %vm405
      %vm487 = vmand %vm471, %vm406
      %vm488 = vmand %vm472, %vm407
      %vm489 = vmand %vm473, %vm408
      %vm490 = vmand %vm474, %vm409
      %vm491 = vmand %vm475, %vm410
      %vm492 = vmand %vm476, %vm411
      %vm493 = vmand %vm477, %vm412
      %vm494 = vmand %vm478, %vm413
      %vm495 = vmand %vm479, %vm414
      %vm496 = vmand %vm480, %vm415
      %vm497 = vmand %vm481, %vm416
      %vm498 = vmand %vm482, %vm417
      %vm499 = vmand %vm483, %vm418
      %vm500 = vmand %vm484, %vm418
      %vm501 = vmand %vm485, %vm418
      %vm502 = vmand %vm486, %vm418
      %vm503 = vmand %vm487, %vm418
      %vm504 = vmand %vm488, %vm418
      %vm505 = vmand %vm489, %vm418
      %vm506 = vmand %vm490, %vm418
      %vm507 = vmand %vm491, %vm418
      %vm508 = vmand %vm492, %vm418
      %vm509 = vmand %vm493, %vm418
      %vm510 = vmand %vm494, %vm418
      %vm511 = vmand %vm495, %vm418
      %vm512 = vmand %vm496, %vm418
      %vm513 = vmand %vm497, %vm418
      %vm514 = vmand %vm498, %vm418
      %v515 = vsel %vm499, 1, 0
      %v516 = vsel %vm500, 1, 0
      %v517 = vsel %vm501, 1, 0
      %v518 = vsel %vm502, 1, 0
      %v519 = vsel %vm503, 1, 0
      %v520 = vsel %vm504, 1, 0
      %v521 = vsel %vm505, 1, 0
      %v522 = vsel %vm506, 1, 0
      %v523 = vsel %vm507, 1, 0
      %v524 = vsel %vm508, 1, 0
      %v525 = vsel %vm509, 1, 0
      %v526 = vsel %vm510, 1, 0
      %v527 = vsel %vm511, 1, 0
      %v528 = vsel %vm512, 1, 0
      %v529 = vsel %vm513, 1, 0
      %v530 = vsel %vm514, 1, 0
      %v531 = vcvt.s32.f32 %v515
      %v532 = vcvt.s32.f32 %v516
      %v533 = vcvt.s32.f32 %v517
      %v534 = vcvt.s32.f32 %v518
      %v535 = vcvt.s32.f32 %v519
      %v536 = vcvt.s32.f32 %v520
      %v537 = vcvt.s32.f32 %v521
      %v538 = vcvt.s32.f32 %v522
      %v539 = vcvt.s32.f32 %v523
      %v540 = vcvt.s32.f32 %v524
      %v541 = vcvt.s32.f32 %v525
      %v542 = vcvt.s32.f32 %v526
      %v543 = vcvt.s32.f32 %v527
      %v544 = vcvt.s32.f32 %v528
      %v545 = vcvt.s32.f32 %v529
      %v546 = vcvt.s32.f32 %v530
      %v547 = vld [vmem:[#allocation2] sm:$0x1]
      %v548 = vmul.f32 %v219, %v451
      %v549 = vmul.f32 %v221, %v452
      %v550 = vmul.f32 %v223, %v453
      %v551 = vmul.f32 %v225, %v454
      %v552 = vmul.f32 %v227, %v455
      %v553 = vmul.f32 %v229, %v456
      %v554 = vmul.f32 %v231, %v457
      %v555 = vmul.f32 %v233, %v458
      %v556 = vmul.f32 %v235, %v459
      %v557 = vmul.f32 %v237, %v460
      %v558 = vmul.f32 %v239, %v461
      %v559 = vmul.f32 %v241, %v462
      %v560 = vmul.f32 %v243, %v463
      %v561 = vmul.f32 %v245, %v464
      %v562 = vmul.f32 %v247, %v465
      %v563 = vmul.f32 %v249, %v466
      %v564 = vadd.f32 %v548, %v549
      %v565 = vadd.f32 %v564, %v550
      %v566 = vadd.f32 %v565, %v551
      %v567 = vadd.f32 %v566, %v552
      %v568 = vadd.f32 %v567, %v553
      %v569 = vadd.f32 %v568, %v554
      %v570 = vadd.f32 %v569, %v555
      %v571 = vadd.f32 %v570, %v556
      %v572 = vadd.f32 %v571, %v557
      %v573 = vadd.f32 %v572, %v558
      %v574 = vadd.f32 %v573, %v559
      %v575 = vadd.f32 %v574, %v560
      %v576 = vadd.f32 %v575, %v561
      %v577 = vadd.f32 %v576, %v562
      %v578 = vadd.f32 %v577, %v563
      %v579 = vrot.slane %v578, 4
      %v580 = vadd.f32 %v578, %v579
      %v581 = vrot.slane %v580, 2
      %v582 = vadd.f32 %v580, %v581
      %v583 = vrot.slane %v582, 1
      %v584 = vadd.f32 %v582, %v583
      %v585 = vadd.f32 %v547, %v584
      %586 = vst [vmem:[#allocation2] sm:$0x1] %v585
      %v587 = vld [vmem:[#allocation3] sm:$0x1]
      %v588 = vmul.f32 %v531, %v140
      %v589 = vmul.f32 %v532, %v145
      %v590 = vmul.f32 %v533, %v150
      %v591 = vmul.f32 %v534, %v155
      %v592 = vmul.f32 %v535, %v160
      %v593 = vmul.f32 %v536, %v165
      %v594 = vmul.f32 %v537, %v170
      %v595 = vmul.f32 %v538, %v175
      %v596 = vmul.f32 %v539, %v180
      %v597 = vmul.f32 %v540, %v185
      %v598 = vmul.f32 %v541, %v190
      %v599 = vmul.f32 %v542, %v195
      %v600 = vmul.f32 %v543, %v200
      %v601 = vmul.f32 %v544, %v205
      %v602 = vmul.f32 %v545, %v210
      %v603 = vmul.f32 %v546, %v215
      %v604 = vadd.f32 %v588, %v589
      %v605 = vadd.f32 %v604, %v590
      %v606 = vadd.f32 %v605, %v591
      %v607 = vadd.f32 %v606, %v592
      %v608 = vadd.f32 %v607, %v593
      %v609 = vadd.f32 %v608, %v594
      %v610 = vadd.f32 %v609, %v595
      %v611 = vadd.f32 %v610, %v596
      %v612 = vadd.f32 %v611, %v597
      %v613 = vadd.f32 %v612, %v598
      %v614 = vadd.f32 %v613, %v599
      %v615 = vadd.f32 %v614, %v600
      %v616 = vadd.f32 %v615, %v601
      %v617 = vadd.f32 %v616, %v602
      %v618 = vadd.f32 %v617, %v603
      %v619 = vrot.slane %v618, 4
      %v620 = vadd.f32 %v618, %v619
      %v621 = vrot.slane %v620, 2
      %v622 = vadd.f32 %v620, %v621
      %v623 = vrot.slane %v622, 1
      %v624 = vadd.f32 %v622, %v623
      %v625 = vadd.f32 %v587, %v624
      %626 = vst [vmem:[#allocation3] sm:$0x1] %v625
      %v627 = vld [vmem:[#allocation4] sm:$0x1]
      %v628 = vadd.f32 %v531, %v532
      %v629 = vadd.f32 %v628, %v533
      %v630 = vadd.f32 %v629, %v534
      %v631 = vadd.f32 %v630, %v535
      %v632 = vadd.f32 %v631, %v536
      %v633 = vadd.f32 %v632, %v537
      %v634 = vadd.f32 %v633, %v538
      %v635 = vadd.f32 %v634, %v539
      %v636 = vadd.f32 %v635, %v540
      %v637 = vadd.f32 %v636, %v541
      %v638 = vadd.f32 %v637, %v542
      %v639 = vadd.f32 %v638, %v543
      %v640 = vadd.f32 %v639, %v544
      %v641 = vadd.f32 %v640, %v545
      %v642 = vadd.f32 %v641, %v546
      %v643 = vrot.slane %v642, 4
      %v644 = vadd.f32 %v642, %v643
      %v645 = vrot.slane %v644, 2
      %v646 = vadd.f32 %v644, %v645
      %v647 = vrot.slane %v646, 1
      %v648 = vadd.f32 %v646, %v647
      %v649 = vadd.f32 %v627, %v648
      %650 = vst [vmem:[#allocation4] sm:$0x1] %v649
    $region29: #{tpu_custom_call.1} parent=1 // pred_fallthru
      _
    %p651 = pneg %p344
    // Predicated region
    $region30: #{tpu_custom_call.1} parent=1 // pred_check
      _
    $region31: #{tpu_custom_call.1} parent=1 // pred_check_branch
      %653 = sbr.rel (%p344) target = $region33
    $region32: #{tpu_custom_call.1} parent=1 // pred_region
      %v654 = vsel %vm319, 1, 0
      %v655 = vsel %vm320, 1, 0
      %v656 = vsel %vm321, 1, 0
      %v657 = vsel %vm322, 1, 0
      %v658 = vsel %vm323, 1, 0
      %v659 = vsel %vm324, 1, 0
      %v660 = vsel %vm325, 1, 0
      %v661 = vsel %vm326, 1, 0
      %v662 = vsel %vm327, 1, 0
      %v663 = vsel %vm328, 1, 0
      %v664 = vsel %vm329, 1, 0
      %v665 = vsel %vm330, 1, 0
      %v666 = vsel %vm331, 1, 0
      %v667 = vsel %vm332, 1, 0
      %v668 = vsel %vm333, 1, 0
      %v669 = vsel %vm334, 1, 0
      %v670 = vcvt.s32.f32 %v654
      %v671 = vcvt.s32.f32 %v655
      %v672 = vcvt.s32.f32 %v656
      %v673 = vcvt.s32.f32 %v657
      %v674 = vcvt.s32.f32 %v658
      %v675 = vcvt.s32.f32 %v659
      %v676 = vcvt.s32.f32 %v660
      %v677 = vcvt.s32.f32 %v661
      %v678 = vcvt.s32.f32 %v662
      %v679 = vcvt.s32.f32 %v663
      %v680 = vcvt.s32.f32 %v664
      %v681 = vcvt.s32.f32 %v665
      %v682 = vcvt.s32.f32 %v666
      %v683 = vcvt.s32.f32 %v667
      %v684 = vcvt.s32.f32 %v668
      %v685 = vcvt.s32.f32 %v669
      %v686 = vld [vmem:[#allocation2] sm:$0x1]
      %v687 = vadd.f32 %v219, %v221
      %v688 = vadd.f32 %v687, %v223
      %v689 = vadd.f32 %v688, %v225
      %v690 = vadd.f32 %v689, %v227
      %v691 = vadd.f32 %v690, %v229
      %v692 = vadd.f32 %v691, %v231
      %v693 = vadd.f32 %v692, %v233
      %v694 = vadd.f32 %v693, %v235
      %v695 = vadd.f32 %v694, %v237
      %v696 = vadd.f32 %v695, %v239
      %v697 = vadd.f32 %v696, %v241
      %v698 = vadd.f32 %v697, %v243
      %v699 = vadd.f32 %v698, %v245
      %v700 = vadd.f32 %v699, %v247
      %v701 = vadd.f32 %v700, %v249
      %v702 = vrot.slane %v701, 4
      %v703 = vadd.f32 %v701, %v702
      %v704 = vrot.slane %v703, 2
      %v705 = vadd.f32 %v703, %v704
      %v706 = vrot.slane %v705, 1
      %v707 = vadd.f32 %v705, %v706
      %v708 = vadd.f32 %v686, %v707
      %709 = vst [vmem:[#allocation2] sm:$0x1] %v708
      %v710 = vld [vmem:[#allocation3] sm:$0x1]
      %v711 = vmul.f32 %v670, %v140
      %v712 = vmul.f32 %v671, %v145
      %v713 = vmul.f32 %v672, %v150
      %v714 = vmul.f32 %v673, %v155
      %v715 = vmul.f32 %v674, %v160
      %v716 = vmul.f32 %v675, %v165
      %v717 = vmul.f32 %v676, %v170
      %v718 = vmul.f32 %v677, %v175
      %v719 = vmul.f32 %v678, %v180
      %v720 = vmul.f32 %v679, %v185
      %v721 = vmul.f32 %v680, %v190
      %v722 = vmul.f32 %v681, %v195
      %v723 = vmul.f32 %v682, %v200
      %v724 = vmul.f32 %v683, %v205
      %v725 = vmul.f32 %v684, %v210
      %v726 = vmul.f32 %v685, %v215
      %v727 = vadd.f32 %v711, %v712
      %v728 = vadd.f32 %v727, %v713
      %v729 = vadd.f32 %v728, %v714
      %v730 = vadd.f32 %v729, %v715
      %v731 = vadd.f32 %v730, %v716
      %v732 = vadd.f32 %v731, %v717
      %v733 = vadd.f32 %v732, %v718
      %v734 = vadd.f32 %v733, %v719
      %v735 = vadd.f32 %v734, %v720
      %v736 = vadd.f32 %v735, %v721
      %v737 = vadd.f32 %v736, %v722
      %v738 = vadd.f32 %v737, %v723
      %v739 = vadd.f32 %v738, %v724
      %v740 = vadd.f32 %v739, %v725
      %v741 = vadd.f32 %v740, %v726
      %v742 = vrot.slane %v741, 4
      %v743 = vadd.f32 %v741, %v742
      %v744 = vrot.slane %v743, 2
      %v745 = vadd.f32 %v743, %v744
      %v746 = vrot.slane %v745, 1
      %v747 = vadd.f32 %v745, %v746
      %v748 = vadd.f32 %v710, %v747
      %749 = vst [vmem:[#allocation3] sm:$0x1] %v748
      %v750 = vld [vmem:[#allocation4] sm:$0x1]
      %v751 = vadd.f32 %v670, %v671
      %v752 = vadd.f32 %v751, %v672
      %v753 = vadd.f32 %v752, %v673
      %v754 = vadd.f32 %v753, %v674
      %v755 = vadd.f32 %v754, %v675
      %v756 = vadd.f32 %v755, %v676
      %v757 = vadd.f32 %v756, %v677
      %v758 = vadd.f32 %v757, %v678
      %v759 = vadd.f32 %v758, %v679
      %v760 = vadd.f32 %v759, %v680
      %v761 = vadd.f32 %v760, %v681
      %v762 = vadd.f32 %v761, %v682
      %v763 = vadd.f32 %v762, %v683
      %v764 = vadd.f32 %v763, %v684
      %v765 = vadd.f32 %v764, %v685
      %v766 = vrot.slane %v765, 4
      %v767 = vadd.f32 %v765, %v766
      %v768 = vrot.slane %v767, 2
      %v769 = vadd.f32 %v767, %v768
      %v770 = vrot.slane %v769, 1
      %v771 = vadd.f32 %v769, %v770
      %v772 = vadd.f32 %v750, %v771
      %773 = vst [vmem:[#allocation4] sm:$0x1] %v772
    $region33: #{tpu_custom_call.1} parent=1 // pred_fallthru
      _
    // Predicated region
    $region34: #{tpu_custom_call.1} parent=1 // pred_check
      %p774 = pneg %p34
    $region35: #{tpu_custom_call.1} parent=1 // pred_check_branch
      %776 = sbr.rel (%p774) target = $region37
    $region36: #{tpu_custom_call.1} parent=1 // pred_region
      %v777 = vld [vmem:[#allocation2] sm:$0x1]
      %v778 = vlog2.pop %v777
      %v779 = vmul.f32 %v778, 0.6931472
      %v780 = vld [vmem:[#allocation3] sm:$0x1]
      %v781 = vld [vmem:[#allocation4] sm:$0x1]
      %v782 = vmul.f32 %v781, %v779
      %v783 = vsub.f32 %v780, %v782
      %v784 = vadd.f32 %v781, 1e-10
      %v785 = vrcp.pop %v784
      %v786 = vmul.f32 %v783, %v785
      %v787 = vmul.f32 %v786, -1.0
      %v788 = vlaneseq
      %v789 = vand.u32 %v788, 127
      %v790 = vstv %s32
      %v791 = vadd.s32 %v790, %v789
      %vm792 = vcmp.lt.s32.totalorder %v791, 8
      %v793 = vsel %vm792, 1, 0
      %v794 = vcvt.s32.f32 %v793
      %v795 = vmul.f32 %v787, %v794
      %796 = vst [vmem:[#allocation8] sm:$0x1] %v795
    $region37: #{tpu_custom_call.1} parent=1 // pred_fallthru
      _
    // Predicated region
    $region38: #{tpu_custom_call.1} parent=1 // pred_check
      _
    $region39: #{tpu_custom_call.1} parent=1 // pred_check_branch
      %798 = sbr.rel (0) target = $region41
    $region40: #{tpu_custom_call.1} parent=1 // pred_region
      %s800 = ssub.s32 16, 16
      %801 = vsyncadd [#allocation7], %s800
      %s803 = sshll.u32 [#allocation8], 4
      %s804 = int_to_ptr.vmem [resolvable:$true] %s803
      %806 = dma.vmem_to_hbm [thread:$0]  %s804, 16, %s4, [#allocation7]
    $region41: #{tpu_custom_call.1} parent=1 // pred_fallthru
      _
    // Predicated region
    $region42: #{tpu_custom_call.1} parent=1 // pred_check
      _
    $region43: #{tpu_custom_call.1} parent=1 // pred_check_branch
      %808 = sbr.rel (0) target = $region45
    $region44: #{tpu_custom_call.1} parent=1 // pred_region
      %809 = dma.done [#allocation7], 16
    $region45: #{tpu_custom_call.1} parent=1 // pred_fallthru
      _
    %810 = vsyncpa [#allocation6], 1
    %811 = vsyncpa [#allocation7], 1

</llo_original>
